<compile_context>
chip_gen: v5e
topology: v5e:2x2
jax: 0.10.0
libtpu: 0.0.40
codegen_flags: <defaults>
</compile_context>

<pallas_src>
import functools

import jax
import jax.numpy as jnp
from jax.experimental import pallas as pl
from jax.experimental.pallas import tpu as pltpu

IN_DIM = 156
H1 = 86
H1_PAD = 128          # lane-dense hidden width (zero padded, semantics unchanged)
H2 = 16
OUT_DIM = 2


def mlp_softmax_kernel(x_ref, w1_ref, b1_ref, w2_ref, b2_ref, w3_ref, b3_ref,
                       o_ref):
    # Cast to bf16 in-kernel (avoids a separate XLA convert pass over HBM);
    # all matmuls accumulate in f32, elementwise math stays f32.
    x = x_ref[...].astype(jnp.bfloat16)
    h1 = jnp.dot(x, w1_ref[...], preferred_element_type=jnp.float32)
    h1 = jnp.maximum(h1 + b1_ref[...], 0.0)

    h2 = jnp.dot(h1.astype(jnp.bfloat16), w2_ref[...],
                 preferred_element_type=jnp.float32)
    h2 = jnp.maximum(h2 + b2_ref[...], 0.0)

    logits = jnp.dot(h2.astype(jnp.bfloat16), w3_ref[...],
                     preferred_element_type=jnp.float32)
    logits = logits + b3_ref[...]

    # stable softmax over last dim (nn.Softmax() on 2-D input => dim=1);
    # exact divide so rows sum to 1 to f32 precision.
    m = jnp.max(logits, axis=-1, keepdims=True)
    e = jnp.exp(logits - m)
    denom = jnp.sum(e, axis=-1, keepdims=True)
    o_ref[...] = (e / denom).astype(o_ref.dtype)


def _round_up(n, m):
    return ((n + m - 1) // m) * m


def _pad_and_cast_params(params):
    """Pad hidden width 86->128 with zeros; weights bf16, biases f32."""
    w1, b1, w2, b2, w3, b3 = params
    pad = H1_PAD - H1
    w1p = jnp.pad(w1, ((0, 0), (0, pad))).astype(jnp.bfloat16)   # (156, 128)
    b1p = jnp.pad(b1, ((0, 0), (0, pad))).astype(jnp.float32)    # (1, 128)
    w2p = jnp.pad(w2, ((0, pad), (0, 0))).astype(jnp.bfloat16)   # (128, 16)
    return (w1p, b1p, w2p, b2.astype(jnp.float32),
            w3.astype(jnp.bfloat16), b3.astype(jnp.float32))


@functools.partial(jax.jit, static_argnames=("max_block_b", "min_steps"))
def neural_net_forward(x, params, *, max_block_b=4096, min_steps=2):
    """Forward pass matching NeuralNet.forward. x: (B, 156) float32.

    Params are in (in_features, out_features) layout with (1, out) biases,
    un-padded (i.e. the direct transpose of the PyTorch module's weights).
    """
    w1, b1, w2, b2, w3, b3 = _pad_and_cast_params(params)

    B = x.shape[0]
    # Adaptive tiling: big tiles (amortize per-step overhead), at least
    # `min_steps` grid steps (megacore on v7x), per-block padding < 8 rows.
    num_blocks = max(min(min_steps, pl.cdiv(B, 8)), pl.cdiv(B, max_block_b))
    num_blocks = max(num_blocks, 1)
    tb = _round_up(pl.cdiv(B, num_blocks), 8)
    b_pad = num_blocks * tb
    if b_pad != B:
        x = jnp.pad(x, ((0, b_pad - B), (0, 0)))
    x = x.astype(jnp.float32)   # kernel casts to bf16 internally

    resident = lambda arr: pl.BlockSpec(arr.shape, lambda i: (0, 0))

    out = pl.pallas_call(
        mlp_softmax_kernel,
        out_shape=jax.ShapeDtypeStruct((b_pad, OUT_DIM), jnp.float32),
        grid=(num_blocks,),
        in_specs=[
            pl.BlockSpec((tb, IN_DIM), lambda i: (i, 0)),   # x tile (pipelined)
            resident(w1), resident(b1),                      # weights VMEM-resident
            resident(w2), resident(b2),
            resident(w3), resident(b3),
        ],
        out_specs=pl.BlockSpec((tb, OUT_DIM), lambda i: (i, 0)),
        compiler_params=pltpu.CompilerParams(
            dimension_semantics=("parallel",),                # megacore on v7x
            vmem_limit_bytes=48 * 1024 * 1024),
    )(x, w1, b1, w2, b2, w3, b3)
    return out[:B]


def init_params(key):
    # Deterministic init mimicking PyTorch's Linear default:
    # uniform(-1/sqrt(fan_in), 1/sqrt(fan_in)). Weights as (in, out),
    # biases as (1, out).
    def linear(key, fan_in, fan_out):
        kw, kb = jax.random.split(key)
        bound = 1.0 / jnp.sqrt(fan_in)
        w = jax.random.uniform(kw, (fan_in, fan_out), jnp.float32, -bound, bound)
        b = jax.random.uniform(kb, (1, fan_out), jnp.float32, -bound, bound)
        return w, b

    k1, k2, k3 = jax.random.split(key, 3)
    w1, b1 = linear(k1, IN_DIM, H1)
    w2, b2 = linear(k2, H1, H2)
    w3, b3 = linear(k3, H2, OUT_DIM)
    return w1, b1, w2, b2, w3, b3


def reference_forward_f32(x, params):
    """Pure-f32 reference: exact semantics of the PyTorch module."""
    w1, b1, w2, b2, w3, b3 = params
    h1 = jnp.maximum(x @ w1 + b1, 0.0)
    h2 = jnp.maximum(h1 @ w2 + b2, 0.0)
    logits = h2 @ w3 + b3
    return jax.nn.softmax(logits, axis=-1)


def reference_forward_matched(x, params):
    """Reference applying the same bf16 casts the kernel uses."""
    w1, b1, w2, b2, w3, b3 = params
    h1 = jnp.maximum(
        jnp.dot(x.astype(jnp.bfloat16), w1.astype(jnp.bfloat16),
                preferred_element_type=jnp.float32) + b1, 0.0)
    h2 = jnp.maximum(
        jnp.dot(h1.astype(jnp.bfloat16), w2.astype(jnp.bfloat16),
                preferred_element_type=jnp.float32) + b2, 0.0)
    logits = jnp.dot(h2.astype(jnp.bfloat16), w3.astype(jnp.bfloat16),
                     preferred_element_type=jnp.float32) + b3
    m = jnp.max(logits, axis=-1, keepdims=True)
    e = jnp.exp(logits - m)
    return e / jnp.sum(e, axis=-1, keepdims=True)


if __name__ == "__main__":
    key = jax.random.PRNGKey(0)
    kx, kx2, kx3, kp = jax.random.split(key, 4)
    params = init_params(kp)

    # Case 1: batch exercising the grid (2 tiles of 128 rows, megacore path).
    B = 256
    x = jax.random.normal(kx, (B, IN_DIM), jnp.float32)
    out = jax.block_until_ready(neural_net_forward(x, params))
    assert out.shape == (B, OUT_DIM)
    ref_matched = reference_forward_matched(x, params)
    ref_f32 = reference_forward_f32(x, params)
    assert jnp.allclose(out, ref_matched, atol=1e-3, rtol=1e-3)
    assert jnp.allclose(out, ref_f32, atol=3e-2)           # bf16 tolerance
    assert jnp.allclose(jnp.sum(out, axis=-1), 1.0, atol=1e-3)

    # Case 2: tiny batch (B=8) — single block.
    B2 = 8
    x2 = jax.random.normal(kx2, (B2, IN_DIM), jnp.float32)
    out2 = jax.block_until_ready(neural_net_forward(x2, params))
    assert out2.shape == (B2, OUT_DIM)
    assert jnp.allclose(out2, reference_forward_matched(x2, params),
                        atol=1e-3, rtol=1e-3)
    assert jnp.allclose(jnp.sum(out2, axis=-1), 1.0, atol=1e-3)

    # Case 3: ragged batch (B=37) — adaptive tile + trailing-row padding path.
    B3 = 37
    x3 = jax.random.normal(kx3, (B3, IN_DIM), jnp.float32)
    out3 = jax.block_until_ready(neural_net_forward(x3, params))
    assert out3.shape == (B3, OUT_DIM)
    assert jnp.allclose(out3, reference_forward_matched(x3, params),
                        atol=1e-3, rtol=1e-3)
    assert jnp.allclose(jnp.sum(out3, axis=-1), 1.0, atol=1e-3)

    print("KERNEL_OK")
</pallas_src>

<mosaic_0001>
module attributes {stable_mosaic.version = 11 : i64} {
  func.func @mlp_softmax_kernel(%arg0: i32, %arg1: memref<128x156xf32, #tpu.memory_space<vmem>>, %arg2: memref<156x128xbf16, #tpu.memory_space<vmem>>, %arg3: memref<1x128xf32, #tpu.memory_space<vmem>>, %arg4: memref<128x16xbf16, #tpu.memory_space<vmem>>, %arg5: memref<1x16xf32, #tpu.memory_space<vmem>>, %arg6: memref<16x2xbf16, #tpu.memory_space<vmem>>, %arg7: memref<1x2xf32, #tpu.memory_space<vmem>>, %arg8: memref<128x2xf32, #tpu.memory_space<vmem>>) attributes {dimension_semantics = [#tpu.dimension_semantics<parallel>], iteration_bounds = array<i64: 2>, scalar_prefetch = 0 : i64, scratch_operands = 0 : i64, tpu.core_type = #tpu.core_type<tc>, window_params = [{transform_indices = @transform_0, window_bounds = array<i64: 128, 156>}, {pipeline_mode = #tpu.pipeline_mode<synchronous>, transform_indices = @transform_1, window_bounds = array<i64: 156, 128>}, {pipeline_mode = #tpu.pipeline_mode<synchronous>, transform_indices = @transform_2, window_bounds = array<i64: 1, 128>}, {pipeline_mode = #tpu.pipeline_mode<synchronous>, transform_indices = @transform_3, window_bounds = array<i64: 128, 16>}, {pipeline_mode = #tpu.pipeline_mode<synchronous>, transform_indices = @transform_4, window_bounds = array<i64: 1, 16>}, {pipeline_mode = #tpu.pipeline_mode<synchronous>, transform_indices = @transform_5, window_bounds = array<i64: 16, 2>}, {pipeline_mode = #tpu.pipeline_mode<synchronous>, transform_indices = @transform_6, window_bounds = array<i64: 1, 2>}, {transform_indices = @transform_7, window_bounds = array<i64: 128, 2>}]} {
    %c0 = arith.constant 0 : index
    %c0_0 = arith.constant 0 : index
    %0 = vector.load %arg1[%c0, %c0_0] : memref<128x156xf32, #tpu.memory_space<vmem>>, vector<128x156xf32>
    %1 = arith.truncf %0 : vector<128x156xf32> to vector<128x156xbf16>
    %c0_1 = arith.constant 0 : index
    %c0_2 = arith.constant 0 : index
    %2 = vector.load %arg2[%c0_1, %c0_2] : memref<156x128xbf16, #tpu.memory_space<vmem>>, vector<156x128xbf16>
    %cst = arith.constant dense<0.000000e+00> : vector<128x128xf32>
    %3 = tpu.matmul %1, %2, %cst {dimension_numbers = #tpu.dot_dimension_numbers<[1], [0], [0], [1], [0, 0, 1, 1], [], []>} : vector<128x156xbf16>, vector<156x128xbf16>, vector<128x128xf32> -> vector<128x128xf32>
    %c0_3 = arith.constant 0 : index
    %c0_4 = arith.constant 0 : index
    %4 = vector.load %arg3[%c0_3, %c0_4] : memref<1x128xf32, #tpu.memory_space<vmem>>, vector<1x128xf32>
    %5 = vector.broadcast %4 : vector<1x128xf32> to vector<128x128xf32>
    %6 = arith.addf %3, %5 : vector<128x128xf32>
    %cst_5 = arith.constant 0.000000e+00 : f32
    %7 = vector.broadcast %cst_5 : f32 to vector<128x128xf32>
    %8 = arith.maximumf %6, %7 : vector<128x128xf32>
    %9 = arith.truncf %8 : vector<128x128xf32> to vector<128x128xbf16>
    %c0_6 = arith.constant 0 : index
    %c0_7 = arith.constant 0 : index
    %10 = vector.load %arg4[%c0_6, %c0_7] : memref<128x16xbf16, #tpu.memory_space<vmem>>, vector<128x16xbf16>
    %cst_8 = arith.constant dense<0.000000e+00> : vector<128x16xf32>
    %11 = tpu.matmul %9, %10, %cst_8 {dimension_numbers = #tpu.dot_dimension_numbers<[1], [0], [0], [1], [0, 0, 1, 1], [], []>} : vector<128x128xbf16>, vector<128x16xbf16>, vector<128x16xf32> -> vector<128x16xf32>
    %c0_9 = arith.constant 0 : index
    %c0_10 = arith.constant 0 : index
    %12 = vector.load %arg5[%c0_9, %c0_10] : memref<1x16xf32, #tpu.memory_space<vmem>>, vector<1x16xf32>
    %13 = vector.broadcast %12 : vector<1x16xf32> to vector<128x16xf32>
    %14 = arith.addf %11, %13 : vector<128x16xf32>
    %cst_11 = arith.constant 0.000000e+00 : f32
    %15 = vector.broadcast %cst_11 : f32 to vector<128x16xf32>
    %16 = arith.maximumf %14, %15 : vector<128x16xf32>
    %17 = arith.truncf %16 : vector<128x16xf32> to vector<128x16xbf16>
    %c0_12 = arith.constant 0 : index
    %c0_13 = arith.constant 0 : index
    %18 = vector.load %arg6[%c0_12, %c0_13] : memref<16x2xbf16, #tpu.memory_space<vmem>>, vector<16x2xbf16>
    %cst_14 = arith.constant dense<0.000000e+00> : vector<128x2xf32>
    %19 = tpu.matmul %17, %18, %cst_14 {dimension_numbers = #tpu.dot_dimension_numbers<[1], [0], [0], [1], [0, 0, 1, 1], [], []>} : vector<128x16xbf16>, vector<16x2xbf16>, vector<128x2xf32> -> vector<128x2xf32>
    %c0_15 = arith.constant 0 : index
    %c0_16 = arith.constant 0 : index
    %20 = vector.load %arg7[%c0_15, %c0_16] : memref<1x2xf32, #tpu.memory_space<vmem>>, vector<1x2xf32>
    %21 = vector.broadcast %20 : vector<1x2xf32> to vector<128x2xf32>
    %22 = arith.addf %19, %21 : vector<128x2xf32>
    %cst_17 = arith.constant dense<0xFF800000> : vector<128xf32>
    %23 = vector.multi_reduction <maximumf>, %22, %cst_17 [1] : vector<128x2xf32> to vector<128xf32>
    %24 = vector.shape_cast %23 : vector<128xf32> to vector<128x1xf32>
    %25 = vector.broadcast %24 : vector<128x1xf32> to vector<128x2xf32>
    %26 = arith.subf %22, %25 : vector<128x2xf32>
    %27 = math.exp %26 : vector<128x2xf32>
    %cst_18 = arith.constant dense<0.000000e+00> : vector<128xf32>
    %28 = vector.multi_reduction <add>, %27, %cst_18 [1] : vector<128x2xf32> to vector<128xf32>
    %29 = vector.shape_cast %28 : vector<128xf32> to vector<128x1xf32>
    %30 = vector.broadcast %29 : vector<128x1xf32> to vector<128x2xf32>
    %31 = arith.divf %27, %30 : vector<128x2xf32>
    %c0_19 = arith.constant 0 : index
    %c0_20 = arith.constant 0 : index
    %32 = vector.load %arg8[%c0_19, %c0_20] : memref<128x2xf32, #tpu.memory_space<vmem>>, vector<128x2xf32>
    tpu.vector_store %arg8[%c0_19, %c0_20], %31 {strides = array<i32>} : memref<128x2xf32, #tpu.memory_space<vmem>>, vector<128x2xf32>,
    return
  }
  func.func @transform_0(%arg0: i32) -> (i32, i32) {
    %c0_i32 = arith.constant 0 : i32
    %c0_i32_0 = arith.constant 0 : i32
    return %arg0, %c0_i32 : i32, i32
  }
  func.func @transform_1(%arg0: i32) -> (i32, i32) {
    %c0_i32 = arith.constant 0 : i32
    %c0_i32_0 = arith.constant 0 : i32
    %c0_i32_1 = arith.constant 0 : i32
    return %c0_i32, %c0_i32_0 : i32, i32
  }
  func.func @transform_2(%arg0: i32) -> (i32, i32) {
    %c0_i32 = arith.constant 0 : i32
    %c0_i32_0 = arith.constant 0 : i32
    %c0_i32_1 = arith.constant 0 : i32
    return %c0_i32, %c0_i32_0 : i32, i32
  }
  func.func @transform_3(%arg0: i32) -> (i32, i32) {
    %c0_i32 = arith.constant 0 : i32
    %c0_i32_0 = arith.constant 0 : i32
    %c0_i32_1 = arith.constant 0 : i32
    return %c0_i32, %c0_i32_0 : i32, i32
  }
  func.func @transform_4(%arg0: i32) -> (i32, i32) {
    %c0_i32 = arith.constant 0 : i32
    %c0_i32_0 = arith.constant 0 : i32
    %c0_i32_1 = arith.constant 0 : i32
    return %c0_i32, %c0_i32_0 : i32, i32
  }
  func.func @transform_5(%arg0: i32) -> (i32, i32) {
    %c0_i32 = arith.constant 0 : i32
    %c0_i32_0 = arith.constant 0 : i32
    %c0_i32_1 = arith.constant 0 : i32
    return %c0_i32, %c0_i32_0 : i32, i32
  }
  func.func @transform_6(%arg0: i32) -> (i32, i32) {
    %c0_i32 = arith.constant 0 : i32
    %c0_i32_0 = arith.constant 0 : i32
    %c0_i32_1 = arith.constant 0 : i32
    return %c0_i32, %c0_i32_0 : i32, i32
  }
  func.func @transform_7(%arg0: i32) -> (i32, i32) {
    %c0_i32 = arith.constant 0 : i32
    %c0_i32_0 = arith.constant 0 : i32
    return %arg0, %c0_i32 : i32, i32
  }
}

</mosaic_0001>

<llo_original>
// kernel: neural_net_forward.1
$region0: #{neural_net_forward.1}
  #allocation0 [shape = 'u32[]', space=smem, size = 0x4, offset = 0x4, fixed_abs, tag = 'smem constant byte address 0x4 - core index']
  #allocation1 [shape = 'u32[72,128]{1,0:T(1,128)}', space=vmem, size = 0x9000, scoped, tag = 'internal scratch']
  %s0 = inlined_call_operand.vmem [shape: f32[256,156], index: 0, kind: input, shape index: {}]
  %s1 = inlined_call_operand.vmem [shape: bf16[156,128], index: 1, kind: input, shape index: {}]
  %s2 = inlined_call_operand.vmem [shape: f32[1,128], index: 2, kind: input, shape index: {}]
  %s3 = inlined_call_operand.vmem [shape: bf16[128,16], index: 3, kind: input, shape index: {}]
  %s4 = inlined_call_operand.vmem [shape: f32[1,16], index: 4, kind: input, shape index: {}]
  %s5 = inlined_call_operand.vmem [shape: bf16[16,2], index: 5, kind: input, shape index: {}]
  %s6 = inlined_call_operand.vmem [shape: f32[1,2], index: 6, kind: input, shape index: {}]
  %s7 = inlined_call_operand.vmem [shape: f32[256,2], index: 7, kind: output, shape index: {}]
  %s8 = sld [smem:[#allocation0]]
  $region61: #{neural_net_forward.1} parent=0
    _
  %s10 = ssub.s32 1, %s8
  %s11 = scalar_select 0, %s10, %s8
  loop: start=0, step=1, limit=4
  $region2: #{neural_net_forward.1} parent=0 // loop_pre_header
    _
  $region3: #{neural_net_forward.1} parent=0 // loop_header
    %s13 = sphi 0, %s17
    %p14 = scmp.ge.s32.totalorder %s13, 4
    %s23 = sphi 0, %s25
    %s26 = sphi 0, %s23
    %s27 = sphi 0, %s26
    %s43 = sphi 0, %s27
    %s47 = sphi 0, %s47
    %s49 = sphi 0, %s47
    %s50 = sphi 0, %s49
    %s64 = sphi 0, %s50
    %s68 = sphi 0, %s68
    %s70 = sphi 0, %s68
    %s71 = sphi 0, %s70
    %s85 = sphi 0, %s71
    %s89 = sphi 0, %s89
    %s91 = sphi 0, %s89
    %s92 = sphi 0, %s91
    %s106 = sphi 0, %s92
    %s110 = sphi 0, %s110
    %s112 = sphi 0, %s110
    %s113 = sphi 0, %s112
    %s127 = sphi 0, %s113
    %s131 = sphi 0, %s131
    %s133 = sphi 0, %s131
    %s134 = sphi 0, %s133
    %s148 = sphi 0, %s134
    %s152 = sphi 0, %s152
    %s154 = sphi 0, %s152
    %s155 = sphi 0, %s154
    %s169 = sphi 0, %s155
    %s175 = sphi 0, %s177
    %s178 = sphi 0, %s175
    %s179 = sphi 0, %s178
    %s195 = sphi 0, %s179
  $region4: #{neural_net_forward.1} parent=0 // loop_header_branch
    %16 = sbr.rel (%p14) target = $region8
  $region5: #{neural_net_forward.1} parent=0 // loop_body
    %s18 = ssub.s32 %s13, 1
    %s19 = ssub.s32 %s13, 2
    %s20 = sadd.s32 %s13, 1
    %s21 = ssub.s32 %s13, %s20
    %p22 = scmp.eq.s32.totalorder %s21, 0
    %s24 = sadd.s32 %s23, 1
    %s25 = scalar_select %p22, %s23, %s24
    %p28 = pneg %p22
    %p29 = scmp.eq.s32.totalorder %s13, 1
    %p30 = por %p28, %p29
    %p31 = scmp.ne.s32.totalorder %s23, %s26
    %p32 = scmp.eq.s32.totalorder %s13, 0
    %p33 = por %p31, %p32
    %p34 = scmp.ne.s32.totalorder %s23, %s26
    %p35 = scmp.eq.s32.totalorder %s18, 1
    %p36 = por %p34, %p35
    %p37 = scmp.ne.s32.totalorder %s26, %s27
    %p38 = scmp.eq.s32.totalorder %s18, 0
    %p39 = por %p37, %p38
    %p40 = scmp.ne.s32.totalorder %s26, %s27
    %p41 = scmp.eq.s32.totalorder %s19, 1
    %p42 = por %p40, %p41
    %p44 = scmp.ne.s32.totalorder %s27, %s43
    %p45 = scmp.eq.s32.totalorder %s19, 0
    %p46 = por %p44, %p45
    %s48 = sadd.s32 %s47, 1
    %p51 = scmp.eq.s32.totalorder %s13, 1
    %p52 = scmp.ne.s32.totalorder %s47, %s49
    %p53 = scmp.eq.s32.totalorder %s13, 0
    %p54 = por %p52, %p53
    %p55 = scmp.ne.s32.totalorder %s47, %s49
    %p56 = scmp.eq.s32.totalorder %s18, 1
    %p57 = por %p55, %p56
    %p58 = scmp.ne.s32.totalorder %s49, %s50
    %p59 = scmp.eq.s32.totalorder %s18, 0
    %p60 = por %p58, %p59
    %p61 = scmp.ne.s32.totalorder %s49, %s50
    %p62 = scmp.eq.s32.totalorder %s19, 1
    %p63 = por %p61, %p62
    %p65 = scmp.ne.s32.totalorder %s50, %s64
    %p66 = scmp.eq.s32.totalorder %s19, 0
    %p67 = por %p65, %p66
    %s69 = sadd.s32 %s68, 1
    %p72 = scmp.eq.s32.totalorder %s13, 1
    %p73 = scmp.ne.s32.totalorder %s68, %s70
    %p74 = scmp.eq.s32.totalorder %s13, 0
    %p75 = por %p73, %p74
    %p76 = scmp.ne.s32.totalorder %s68, %s70
    %p77 = scmp.eq.s32.totalorder %s18, 1
    %p78 = por %p76, %p77
    %p79 = scmp.ne.s32.totalorder %s70, %s71
    %p80 = scmp.eq.s32.totalorder %s18, 0
    %p81 = por %p79, %p80
    %p82 = scmp.ne.s32.totalorder %s70, %s71
    %p83 = scmp.eq.s32.totalorder %s19, 1
    %p84 = por %p82, %p83
    %p86 = scmp.ne.s32.totalorder %s71, %s85
    %p87 = scmp.eq.s32.totalorder %s19, 0
    %p88 = por %p86, %p87
    %s90 = sadd.s32 %s89, 1
    %p93 = scmp.eq.s32.totalorder %s13, 1
    %p94 = scmp.ne.s32.totalorder %s89, %s91
    %p95 = scmp.eq.s32.totalorder %s13, 0
    %p96 = por %p94, %p95
    %p97 = scmp.ne.s32.totalorder %s89, %s91
    %p98 = scmp.eq.s32.totalorder %s18, 1
    %p99 = por %p97, %p98
    %p100 = scmp.ne.s32.totalorder %s91, %s92
    %p101 = scmp.eq.s32.totalorder %s18, 0
    %p102 = por %p100, %p101
    %p103 = scmp.ne.s32.totalorder %s91, %s92
    %p104 = scmp.eq.s32.totalorder %s19, 1
    %p105 = por %p103, %p104
    %p107 = scmp.ne.s32.totalorder %s92, %s106
    %p108 = scmp.eq.s32.totalorder %s19, 0
    %p109 = por %p107, %p108
    %s111 = sadd.s32 %s110, 1
    %p114 = scmp.eq.s32.totalorder %s13, 1
    %p115 = scmp.ne.s32.totalorder %s110, %s112
    %p116 = scmp.eq.s32.totalorder %s13, 0
    %p117 = por %p115, %p116
    %p118 = scmp.ne.s32.totalorder %s110, %s112
    %p119 = scmp.eq.s32.totalorder %s18, 1
    %p120 = por %p118, %p119
    %p121 = scmp.ne.s32.totalorder %s112, %s113
    %p122 = scmp.eq.s32.totalorder %s18, 0
    %p123 = por %p121, %p122
    %p124 = scmp.ne.s32.totalorder %s112, %s113
    %p125 = scmp.eq.s32.totalorder %s19, 1
    %p126 = por %p124, %p125
    %p128 = scmp.ne.s32.totalorder %s113, %s127
    %p129 = scmp.eq.s32.totalorder %s19, 0
    %p130 = por %p128, %p129
    %s132 = sadd.s32 %s131, 1
    %p135 = scmp.eq.s32.totalorder %s13, 1
    %p136 = scmp.ne.s32.totalorder %s131, %s133
    %p137 = scmp.eq.s32.totalorder %s13, 0
    %p138 = por %p136, %p137
    %p139 = scmp.ne.s32.totalorder %s131, %s133
    %p140 = scmp.eq.s32.totalorder %s18, 1
    %p141 = por %p139, %p140
    %p142 = scmp.ne.s32.totalorder %s133, %s134
    %p143 = scmp.eq.s32.totalorder %s18, 0
    %p144 = por %p142, %p143
    %p145 = scmp.ne.s32.totalorder %s133, %s134
    %p146 = scmp.eq.s32.totalorder %s19, 1
    %p147 = por %p145, %p146
    %p149 = scmp.ne.s32.totalorder %s134, %s148
    %p150 = scmp.eq.s32.totalorder %s19, 0
    %p151 = por %p149, %p150
    %s153 = sadd.s32 %s152, 1
    %p156 = scmp.eq.s32.totalorder %s13, 1
    %p157 = scmp.ne.s32.totalorder %s152, %s154
    %p158 = scmp.eq.s32.totalorder %s13, 0
    %p159 = por %p157, %p158
    %p160 = scmp.ne.s32.totalorder %s152, %s154
    %p161 = scmp.eq.s32.totalorder %s18, 1
    %p162 = por %p160, %p161
    %p163 = scmp.ne.s32.totalorder %s154, %s155
    %p164 = scmp.eq.s32.totalorder %s18, 0
    %p165 = por %p163, %p164
    %p166 = scmp.ne.s32.totalorder %s154, %s155
    %p167 = scmp.eq.s32.totalorder %s19, 1
    %p168 = por %p166, %p167
    %p170 = scmp.ne.s32.totalorder %s155, %s169
    %p171 = scmp.eq.s32.totalorder %s19, 0
    %p172 = por %p170, %p171
    %s173 = ssub.s32 %s13, %s20
    %p174 = scmp.eq.s32.totalorder %s173, 0
    %s176 = sadd.s32 %s175, 1
    %s177 = scalar_select %p174, %s175, %s176
    %p180 = pneg %p174
    %p181 = scmp.eq.s32.totalorder %s13, 1
    %p182 = por %p180, %p181
    %p183 = scmp.ne.s32.totalorder %s175, %s178
    %p184 = scmp.eq.s32.totalorder %s13, 0
    %p185 = por %p183, %p184
    %p186 = scmp.ne.s32.totalorder %s175, %s178
    %p187 = scmp.eq.s32.totalorder %s18, 1
    %p188 = por %p186, %p187
    %p189 = scmp.ne.s32.totalorder %s178, %s179
    %p190 = scmp.eq.s32.totalorder %s18, 0
    %p191 = por %p189, %p190
    %p192 = scmp.ne.s32.totalorder %s178, %s179
    %p193 = scmp.eq.s32.totalorder %s19, 1
    %p194 = por %p192, %p193
    %p196 = scmp.ne.s32.totalorder %s179, %s195
    %p197 = scmp.eq.s32.totalorder %s19, 0
    %p198 = por %p196, %p197
    %p199 = scmp.le.s32.totalorder 1, %s13
    %p200 = scmp.lt.s32.totalorder %s13, 3
    %p201 = pnand %p199, %p200
    %p202 = pneg %p201
    // Predicated region
    $region9: #{neural_net_forward.1} parent=5 // pred_check
      _
    $region10: #{neural_net_forward.1} parent=5 // pred_check_branch
      %204 = sbr.rel (%p201) target = $region12
    $region11: #{neural_net_forward.1} parent=5 // pred_region
      %s205 = ssub.s32 %s13, 1
      // Predicated region
      $region13: #{neural_net_forward.1} parent=11 // pred_check
        %p206 = pneg %p60
      $region14: #{neural_net_forward.1} parent=11 // pred_check_branch
        %208 = sbr.rel (%p206) target = $region16
      $region15: #{neural_net_forward.1} parent=11 // pred_region
        _
      $region16: #{neural_net_forward.1} parent=11 // pred_fallthru
        _
      // Predicated region
      $region17: #{neural_net_forward.1} parent=11 // pred_check
        %p209 = pneg %p81
      $region18: #{neural_net_forward.1} parent=11 // pred_check_branch
        %211 = sbr.rel (%p209) target = $region20
      $region19: #{neural_net_forward.1} parent=11 // pred_region
        _
      $region20: #{neural_net_forward.1} parent=11 // pred_fallthru
        _
      // Predicated region
      $region21: #{neural_net_forward.1} parent=11 // pred_check
        %p212 = pneg %p102
      $region22: #{neural_net_forward.1} parent=11 // pred_check_branch
        %214 = sbr.rel (%p212) target = $region24
      $region23: #{neural_net_forward.1} parent=11 // pred_region
        _
      $region24: #{neural_net_forward.1} parent=11 // pred_fallthru
        _
      // Predicated region
      $region25: #{neural_net_forward.1} parent=11 // pred_check
        %p215 = pneg %p123
      $region26: #{neural_net_forward.1} parent=11 // pred_check_branch
        %217 = sbr.rel (%p215) target = $region28
      $region27: #{neural_net_forward.1} parent=11 // pred_region
        _
      $region28: #{neural_net_forward.1} parent=11 // pred_fallthru
        _
      // Predicated region
      $region29: #{neural_net_forward.1} parent=11 // pred_check
        %p218 = pneg %p144
      $region30: #{neural_net_forward.1} parent=11 // pred_check_branch
        %220 = sbr.rel (%p218) target = $region32
      $region31: #{neural_net_forward.1} parent=11 // pred_region
        _
      $region32: #{neural_net_forward.1} parent=11 // pred_fallthru
        _
      // Predicated region
      $region33: #{neural_net_forward.1} parent=11 // pred_check
        %p221 = pneg %p165
      $region34: #{neural_net_forward.1} parent=11 // pred_check_branch
        %223 = sbr.rel (%p221) target = $region36
      $region35: #{neural_net_forward.1} parent=11 // pred_region
        _
      $region36: #{neural_net_forward.1} parent=11 // pred_fallthru
        _
    $region12: #{neural_net_forward.1} parent=5 // pred_fallthru
      _
    %p224 = scmp.lt.s32.totalorder %s13, 2
    // Predicated region
    $region37: #{neural_net_forward.1} parent=5 // pred_check
      %p225 = pneg %p224
    $region38: #{neural_net_forward.1} parent=5 // pred_check_branch
      %227 = sbr.rel (%p225) target = $region40
    $region39: #{neural_net_forward.1} parent=5 // pred_region
      // Predicated region
      $region41: #{neural_net_forward.1} parent=39 // pred_check
        %p228 = pneg %p33
      $region42: #{neural_net_forward.1} parent=39 // pred_check_branch
        %230 = sbr.rel (%p228) target = $region44
      $region43: #{neural_net_forward.1} parent=39 // pred_region
        %s231 = smul.u32 16, %s13
        %p232 = scmp.lt.s32.totalorder %s231, 31
        %s233 = scalar_select %p232, %s231, 31
        %s234 = smul.addr %s233, 2
        %s235 = smul.addr %s234, 8
        %s236 = scalar_lea.vmem %s0, %s235
        %s237 = smul.u32 16, %s13
      $region44: #{neural_net_forward.1} parent=39 // pred_fallthru
        _
    $region40: #{neural_net_forward.1} parent=5 // pred_fallthru
      _
    %p238 = scmp.le.s32.totalorder 1, %s13
    %p239 = scmp.lt.s32.totalorder %s13, 3
    %p240 = pnand %p238, %p239
    %p241 = pneg %p240
    // Predicated region
    $region45: #{neural_net_forward.1} parent=5 // pred_check
      _
    $region46: #{neural_net_forward.1} parent=5 // pred_check_branch
      %243 = sbr.rel (%p240) target = $region48
    $region47: #{neural_net_forward.1} parent=5 // pred_region
      %s244 = ssub.s32 %s13, 1
      %s245 = smul.u32 16, %s18
      %p246 = scmp.lt.s32.totalorder %s245, 31
      %s247 = scalar_select %p246, %s245, 31
      %s248 = smul.addr %s247, 2
      %s249 = smul.addr %s248, 8
      %s250 = scalar_lea.vmem %s0, %s249
      %p251 = pneg %p39
      %p252 = pneg %p36
      %p253 = pneg %p60
      %p254 = pneg %p57
      %p255 = pneg %p81
      %p256 = pneg %p78
      %p257 = pneg %p102
      %p258 = pneg %p99
      %p259 = pneg %p123
      %p260 = pneg %p120
      %p261 = pneg %p144
      %p262 = pneg %p141
      %p263 = pneg %p165
      %p264 = pneg %p162
      %p265 = pneg %p191
      %p266 = pneg %p188
      %s267 = smul.u32 16, %s18
      %p268 = scmp.lt.s32.totalorder %s267, 31
      %s269 = scalar_select %p268, %s267, 31
      %s270 = smul.addr %s269, 8
      %s271 = scalar_lea.vmem %s7, %s270
      %s272 = smul.u32 16, %s18
      %p273 = scmp.lt.s32.totalorder %s272, 31
      %s274 = scalar_select %p273, %s272, 31
      %s275 = smul.addr %s274, 2
      %s276 = smul.addr %s275, 8
      %s277 = scalar_lea.vmem %s0, %s276
      %s278 = smul.u32 16, %s18
      %s279 = smul.u32 16, %s18
      %p280 = scmp.lt.s32.totalorder %s279, 31
      %s281 = scalar_select %p280, %s279, 31
      %s282 = smul.addr %s281, 8
      %s283 = scalar_lea.vmem %s7, %s282
      %s284 = smul.u32 16, %s18
      %v286 = vld [vmem:[%s277] sm:$0xff]
      %v287 = vld [vmem:[%s277 + $0x8] sm:$0xff]
      %v288 = vld [vmem:[%s277 + $0x10] sm:$0xff]
      %v289 = vld [vmem:[%s277 + $0x18] sm:$0xff]
      %v290 = vld [vmem:[%s277 + $0x20] sm:$0xff]
      %v291 = vld [vmem:[%s277 + $0x28] sm:$0xff]
      %v292 = vld [vmem:[%s277 + $0x30] sm:$0xff]
      %v293 = vld [vmem:[%s277 + $0x38] sm:$0xff]
      %v294 = vld [vmem:[%s277 + $0x40] sm:$0xff]
      %v295 = vld [vmem:[%s277 + $0x48] sm:$0xff]
      %v296 = vld [vmem:[%s277 + $0x50] sm:$0xff]
      %v297 = vld [vmem:[%s277 + $0x58] sm:$0xff]
      %v298 = vld [vmem:[%s277 + $0x60] sm:$0xff]
      %v299 = vld [vmem:[%s277 + $0x68] sm:$0xff]
      %v300 = vld [vmem:[%s277 + $0x70] sm:$0xff]
      %v301 = vld [vmem:[%s277 + $0x78] sm:$0xff]
      %v302 = vld [vmem:[%s277 + $0x80] sm:$0xff]
      %v303 = vld [vmem:[%s277 + $0x88] sm:$0xff]
      %v304 = vld [vmem:[%s277 + $0x90] sm:$0xff]
      %v305 = vld [vmem:[%s277 + $0x98] sm:$0xff]
      %v306 = vld [vmem:[%s277 + $0xa0] sm:$0xff]
      %v307 = vld [vmem:[%s277 + $0xa8] sm:$0xff]
      %v308 = vld [vmem:[%s277 + $0xb0] sm:$0xff]
      %v309 = vld [vmem:[%s277 + $0xb8] sm:$0xff]
      %v310 = vld [vmem:[%s277 + $0xc0] sm:$0xff]
      %v311 = vld [vmem:[%s277 + $0xc8] sm:$0xff]
      %v312 = vld [vmem:[%s277 + $0xd0] sm:$0xff]
      %v313 = vld [vmem:[%s277 + $0xd8] sm:$0xff]
      %v314 = vld [vmem:[%s277 + $0xe0] sm:$0xff]
      %v315 = vld [vmem:[%s277 + $0xe8] sm:$0xff]
      %v316 = vld [vmem:[%s277 + $0xf0] sm:$0xff]
      %v317 = vld [vmem:[%s277 + $0xf8] sm:$0xff]
      %v318 = vpack.c.bf16 %v288, %v286
      %v319 = vpack.c.bf16 %v289, %v287
      %v320 = vpack.c.bf16 %v292, %v290
      %v321 = vpack.c.bf16 %v293, %v291
      %v322 = vpack.c.bf16 %v296, %v294
      %v323 = vpack.c.bf16 %v297, %v295
      %v324 = vpack.c.bf16 %v300, %v298
      %v325 = vpack.c.bf16 %v301, %v299
      %v326 = vpack.c.bf16 %v304, %v302
      %v327 = vpack.c.bf16 %v305, %v303
      %v328 = vpack.c.bf16 %v308, %v306
      %v329 = vpack.c.bf16 %v309, %v307
      %v330 = vpack.c.bf16 %v312, %v310
      %v331 = vpack.c.bf16 %v313, %v311
      %v332 = vpack.c.bf16 %v316, %v314
      %v333 = vpack.c.bf16 %v317, %v315
      %v334 = vld [vmem:[%s1] sm:$0xf]
      %v335 = vld [vmem:[%s1 + $0x4] sm:$0xf]
      %v336 = vld [vmem:[%s1 + $0x8] sm:$0xf]
      %v337 = vld [vmem:[%s1 + $0xc] sm:$0xf]
      %v338 = vld [vmem:[%s1 + $0x10] sm:$0xf]
      %v339 = vld [vmem:[%s1 + $0x14] sm:$0xf]
      %v340 = vld [vmem:[%s1 + $0x18] sm:$0xf]
      %v341 = vld [vmem:[%s1 + $0x1c] sm:$0xf]
      %v342 = vld [vmem:[%s1 + $0x20] sm:$0xf]
      %v343 = vld [vmem:[%s1 + $0x24] sm:$0xf]
      %v344 = vld [vmem:[%s1 + $0x28] sm:$0xf]
      %v345 = vld [vmem:[%s1 + $0x2c] sm:$0xf]
      %v346 = vld [vmem:[%s1 + $0x30] sm:$0xf]
      %v347 = vld [vmem:[%s1 + $0x34] sm:$0xf]
      %v348 = vld [vmem:[%s1 + $0x38] sm:$0xf]
      %v349 = vld [vmem:[%s1 + $0x3c] sm:$0xf]
      %v350 = vld [vmem:[%s1 + $0x40] sm:$0xf]
      %v351 = vld [vmem:[%s1 + $0x44] sm:$0xf]
      %v352 = vld [vmem:[%s1 + $0x48] sm:$0xf]
      %v353 = vld [vmem:[%s1 + $0x4c] sm:$0x3]
      %v354 = vld [vmem:[%s2] sm:$0x1]
      %v356 = vperm.slane %v354, 0
      %v378 = vunpack.c.l.b16 %v334
      %v379 = vunpack.c.l.b16 %v335
      %v380 = vunpack.c.l.b16 %v336
      %v381 = vunpack.c.l.b16 %v337
      %v382 = vunpack.c.l.b16 %v338
      %v383 = vunpack.c.l.b16 %v339
      %v384 = vunpack.c.l.b16 %v340
      %v385 = vunpack.c.l.b16 %v341
      %v386 = vunpack.c.l.b16 %v342
      %v387 = vunpack.c.l.b16 %v343
      %v388 = vunpack.c.l.b16 %v344
      %v389 = vunpack.c.l.b16 %v345
      %v390 = vunpack.c.l.b16 %v346
      %v391 = vunpack.c.l.b16 %v347
      %v392 = vunpack.c.l.b16 %v348
      %v393 = vunpack.c.l.b16 %v349
      %v394 = vunpack.c.l.b16 %v350
      %v395 = vunpack.c.l.b16 %v351
      %v396 = vunpack.c.l.b16 %v352
      %v397 = vunpack.c.l.b16 %v353
      %v398 = vpack.c.b16 %v379, %v378
      %v399 = vpack.c.b16 %v381, %v380
      %v400 = vpack.c.b16 %v383, %v382
      %v401 = vpack.c.b16 %v385, %v384
      %v402 = vpack.c.b16 %v387, %v386
      %v403 = vpack.c.b16 %v389, %v388
      %v404 = vpack.c.b16 %v391, %v390
      %v405 = vpack.c.b16 %v393, %v392
      %v406 = vpack.c.b16 %v395, %v394
      %v407 = vpack.c.b16 %v397, %v396
      %vm417 = vcmask 228352
      %v419 = vsel %vm417, %v319, 0
      %v422 = vsel %vm417, %v321, 0
      %v425 = vsel %vm417, %v323, 0
      %v428 = vsel %vm417, %v325, 0
      %v431 = vsel %vm417, %v327, 0
      %v434 = vsel %vm417, %v329, 0
      %v437 = vsel %vm417, %v331, 0
      %v440 = vsel %vm417, %v333, 0
      %vm442 = vcmask 1045504
      %v444 = vsel %vm442, %v407, 0
      %446 = vmatpush.bf16.msra.mxu0 %v405
      %447 = vmatpush.bf16.msra.mxu0 %v404
      %448 = vmatpush.bf16.msra.mxu0 %v403
      %449 = vmatpush.bf16.msra.mxu0 %v402
      %450 = vmatpush.bf16.msra.mxu0 %v401
      %451 = vmatpush.bf16.msra.mxu0 %v400
      %452 = vmatpush.bf16.msra.mxu0 %v399
      %453 = vmatpush.bf16.msra.mxu0 %v398
      %454 = vmatmul.bf16.gmra.mxu0 %v318
      %v455 = vpop.f32.mrf.mxu0
      %v456 = vadd.f32 %v356, %v455
      %v457 = vpop.f32.mrf.mxu0
      %v458 = vadd.f32 %v356, %v457
      %459 = vmatmul.bf16.gmra.mxu0 %v320
      %v460 = vpop.f32.mrf.mxu0
      %v461 = vadd.f32 %v356, %v460
      %v462 = vpop.f32.mrf.mxu0
      %v463 = vadd.f32 %v356, %v462
      %464 = vmatmul.bf16.gmra.mxu0 %v322
      %v465 = vpop.f32.mrf.mxu0
      %v466 = vadd.f32 %v356, %v465
      %v467 = vpop.f32.mrf.mxu0
      %v468 = vadd.f32 %v356, %v467
      %469 = vmatmul.bf16.gmra.mxu0 %v324
      %v470 = vpop.f32.mrf.mxu0
      %v471 = vadd.f32 %v356, %v470
      %v472 = vpop.f32.mrf.mxu0
      %v473 = vadd.f32 %v356, %v472
      %474 = vmatmul.bf16.gmra.mxu0 %v326
      %v475 = vpop.f32.mrf.mxu0
      %v476 = vadd.f32 %v356, %v475
      %v477 = vpop.f32.mrf.mxu0
      %v478 = vadd.f32 %v356, %v477
      %479 = vmatmul.bf16.gmra.mxu0 %v328
      %v480 = vpop.f32.mrf.mxu0
      %v481 = vadd.f32 %v356, %v480
      %v482 = vpop.f32.mrf.mxu0
      %v483 = vadd.f32 %v356, %v482
      %484 = vmatmul.bf16.gmra.mxu0 %v330
      %v485 = vpop.f32.mrf.mxu0
      %v486 = vadd.f32 %v356, %v485
      %v487 = vpop.f32.mrf.mxu0
      %v488 = vadd.f32 %v356, %v487
      %489 = vmatmul.bf16.gmra.mxu0 %v332
      %v490 = vpop.f32.mrf.mxu0
      %v491 = vadd.f32 %v356, %v490
      %v492 = vpop.f32.mrf.mxu0
      %v493 = vadd.f32 %v356, %v492
      %494 = vdwg.mxu0
      %495 = vmatpush.bf16.msra.mxu0 0
      %496 = vmatpush.bf16.msra.mxu0 0
      %497 = vmatpush.bf16.msra.mxu0 0
      %498 = vmatpush.bf16.msra.mxu0 0
      %499 = vmatpush.bf16.msra.mxu0 0
      %500 = vmatpush.bf16.msra.mxu0 0
      %501 = vmatpush.bf16.msra.mxu0 %v444
      %502 = vmatpush.bf16.msra.mxu0 %v406
      %503 = vmatmul.bf16.gmra.mxu0 %v419
      %v504 = vpop.f32.mrf.mxu0
      %v505 = vadd.f32 %v456, %v504
      %v506 = vpop.f32.mrf.mxu0
      %v507 = vadd.f32 %v458, %v506
      %508 = vmatmul.bf16.gmra.mxu0 %v422
      %v509 = vpop.f32.mrf.mxu0
      %v510 = vadd.f32 %v461, %v509
      %v511 = vpop.f32.mrf.mxu0
      %v512 = vadd.f32 %v463, %v511
      %513 = vmatmul.bf16.gmra.mxu0 %v425
      %v514 = vpop.f32.mrf.mxu0
      %v515 = vadd.f32 %v466, %v514
      %v516 = vpop.f32.mrf.mxu0
      %v517 = vadd.f32 %v468, %v516
      %518 = vmatmul.bf16.gmra.mxu0 %v428
      %v519 = vpop.f32.mrf.mxu0
      %v520 = vadd.f32 %v471, %v519
      %v521 = vpop.f32.mrf.mxu0
      %v522 = vadd.f32 %v473, %v521
      %523 = vmatmul.bf16.gmra.mxu0 %v431
      %v524 = vpop.f32.mrf.mxu0
      %v525 = vadd.f32 %v476, %v524
      %v526 = vpop.f32.mrf.mxu0
      %v527 = vadd.f32 %v478, %v526
      %528 = vmatmul.bf16.gmra.mxu0 %v434
      %v529 = vpop.f32.mrf.mxu0
      %v530 = vadd.f32 %v481, %v529
      %v531 = vpop.f32.mrf.mxu0
      %v532 = vadd.f32 %v483, %v531
      %533 = vmatmul.bf16.gmra.mxu0 %v437
      %v534 = vpop.f32.mrf.mxu0
      %v535 = vadd.f32 %v486, %v534
      %v536 = vpop.f32.mrf.mxu0
      %v537 = vadd.f32 %v488, %v536
      %538 = vmatmul.bf16.gmra.mxu0 %v440
      %v539 = vpop.f32.mrf.mxu0
      %v540 = vadd.f32 %v491, %v539
      %v541 = vpop.f32.mrf.mxu0
      %v542 = vadd.f32 %v493, %v541
      %543 = vdwg.mxu0
      %v544 = vmax.f32 %v505, 0.0
      %v545 = vmax.f32 %v507, 0.0
      %v546 = vmax.f32 %v510, 0.0
      %v547 = vmax.f32 %v512, 0.0
      %v548 = vmax.f32 %v515, 0.0
      %v549 = vmax.f32 %v517, 0.0
      %v550 = vmax.f32 %v520, 0.0
      %v551 = vmax.f32 %v522, 0.0
      %v552 = vmax.f32 %v525, 0.0
      %v553 = vmax.f32 %v527, 0.0
      %v554 = vmax.f32 %v530, 0.0
      %v555 = vmax.f32 %v532, 0.0
      %v556 = vmax.f32 %v535, 0.0
      %v557 = vmax.f32 %v537, 0.0
      %v558 = vmax.f32 %v540, 0.0
      %v559 = vmax.f32 %v542, 0.0
      %v560 = vpack.c.bf16 %v545, %v544
      %v561 = vpack.c.bf16 %v547, %v546
      %v562 = vpack.c.bf16 %v549, %v548
      %v563 = vpack.c.bf16 %v551, %v550
      %v564 = vpack.c.bf16 %v553, %v552
      %v565 = vpack.c.bf16 %v555, %v554
      %v566 = vpack.c.bf16 %v557, %v556
      %v567 = vpack.c.bf16 %v559, %v558
      %v568 = vld [vmem:[%s3] sm:$0xf]
      %v569 = vld [vmem:[%s3 + $0x4] sm:$0xf]
      %v570 = vld [vmem:[%s3 + $0x8] sm:$0xf]
      %v571 = vld [vmem:[%s3 + $0xc] sm:$0xf]
      %v572 = vld [vmem:[%s3 + $0x10] sm:$0xf]
      %v573 = vld [vmem:[%s3 + $0x14] sm:$0xf]
      %v574 = vld [vmem:[%s3 + $0x18] sm:$0xf]
      %v575 = vld [vmem:[%s3 + $0x1c] sm:$0xf]
      %v576 = vld [vmem:[%s3 + $0x20] sm:$0xf]
      %v577 = vld [vmem:[%s3 + $0x24] sm:$0xf]
      %v578 = vld [vmem:[%s3 + $0x28] sm:$0xf]
      %v579 = vld [vmem:[%s3 + $0x2c] sm:$0xf]
      %v580 = vld [vmem:[%s3 + $0x30] sm:$0xf]
      %v581 = vld [vmem:[%s3 + $0x34] sm:$0xf]
      %v582 = vld [vmem:[%s3 + $0x38] sm:$0xf]
      %v583 = vld [vmem:[%s3 + $0x3c] sm:$0xf]
      %v584 = vld [vmem:[%s4] sm:$0x1]
      %v586 = vperm.slane %v584, 0
      %v604 = vunpack.c.l.b16 %v568
      %v605 = vunpack.c.l.b16 %v569
      %v606 = vunpack.c.l.b16 %v570
      %v607 = vunpack.c.l.b16 %v571
      %v608 = vunpack.c.l.b16 %v572
      %v609 = vunpack.c.l.b16 %v573
      %v610 = vunpack.c.l.b16 %v574
      %v611 = vunpack.c.l.b16 %v575
      %v612 = vunpack.c.l.b16 %v576
      %v613 = vunpack.c.l.b16 %v577
      %v614 = vunpack.c.l.b16 %v578
      %v615 = vunpack.c.l.b16 %v579
      %v616 = vunpack.c.l.b16 %v580
      %v617 = vunpack.c.l.b16 %v581
      %v618 = vunpack.c.l.b16 %v582
      %v619 = vunpack.c.l.b16 %v583
      %v620 = vpack.c.b16 %v605, %v604
      %v621 = vpack.c.b16 %v607, %v606
      %v622 = vpack.c.b16 %v609, %v608
      %v623 = vpack.c.b16 %v611, %v610
      %v624 = vpack.c.b16 %v613, %v612
      %v625 = vpack.c.b16 %v615, %v614
      %v626 = vpack.c.b16 %v617, %v616
      %v627 = vpack.c.b16 %v619, %v618
      %636 = vmatpush.bf16.msra.mxu0 %v627
      %637 = vmatpush.bf16.msra.mxu0 %v626
      %638 = vmatpush.bf16.msra.mxu0 %v625
      %639 = vmatpush.bf16.msra.mxu0 %v624
      %640 = vmatpush.bf16.msra.mxu0 %v623
      %641 = vmatpush.bf16.msra.mxu0 %v622
      %642 = vmatpush.bf16.msra.mxu0 %v621
      %643 = vmatpush.bf16.msra.mxu0 %v620
      %644 = vmatmul.bf16.gmra.mxu0 %v560
      %v645 = vpop.f32.mrf.mxu0
      %v646 = vadd.f32 %v586, %v645
      %v647 = vpop.f32.mrf.mxu0
      %v648 = vadd.f32 %v586, %v647
      %649 = vmatmul.bf16.gmra.mxu0 %v561
      %v650 = vpop.f32.mrf.mxu0
      %v651 = vadd.f32 %v586, %v650
      %v652 = vpop.f32.mrf.mxu0
      %v653 = vadd.f32 %v586, %v652
      %654 = vmatmul.bf16.gmra.mxu0 %v562
      %v655 = vpop.f32.mrf.mxu0
      %v656 = vadd.f32 %v586, %v655
      %v657 = vpop.f32.mrf.mxu0
      %v658 = vadd.f32 %v586, %v657
      %659 = vmatmul.bf16.gmra.mxu0 %v563
      %v660 = vpop.f32.mrf.mxu0
      %v661 = vadd.f32 %v586, %v660
      %v662 = vpop.f32.mrf.mxu0
      %v663 = vadd.f32 %v586, %v662
      %664 = vmatmul.bf16.gmra.mxu0 %v564
      %v665 = vpop.f32.mrf.mxu0
      %v666 = vadd.f32 %v586, %v665
      %v667 = vpop.f32.mrf.mxu0
      %v668 = vadd.f32 %v586, %v667
      %669 = vmatmul.bf16.gmra.mxu0 %v565
      %v670 = vpop.f32.mrf.mxu0
      %v671 = vadd.f32 %v586, %v670
      %v672 = vpop.f32.mrf.mxu0
      %v673 = vadd.f32 %v586, %v672
      %674 = vmatmul.bf16.gmra.mxu0 %v566
      %v675 = vpop.f32.mrf.mxu0
      %v676 = vadd.f32 %v586, %v675
      %v677 = vpop.f32.mrf.mxu0
      %v678 = vadd.f32 %v586, %v677
      %679 = vmatmul.bf16.gmra.mxu0 %v567
      %v680 = vpop.f32.mrf.mxu0
      %v681 = vadd.f32 %v586, %v680
      %v682 = vpop.f32.mrf.mxu0
      %v683 = vadd.f32 %v586, %v682
      %684 = vdwg.mxu0
      %v685 = vmax.f32 %v646, 0.0
      %v686 = vmax.f32 %v648, 0.0
      %v687 = vmax.f32 %v651, 0.0
      %v688 = vmax.f32 %v653, 0.0
      %v689 = vmax.f32 %v656, 0.0
      %v690 = vmax.f32 %v658, 0.0
      %v691 = vmax.f32 %v661, 0.0
      %v692 = vmax.f32 %v663, 0.0
      %v693 = vmax.f32 %v666, 0.0
      %v694 = vmax.f32 %v668, 0.0
      %v695 = vmax.f32 %v671, 0.0
      %v696 = vmax.f32 %v673, 0.0
      %v697 = vmax.f32 %v676, 0.0
      %v698 = vmax.f32 %v678, 0.0
      %v699 = vmax.f32 %v681, 0.0
      %v700 = vmax.f32 %v683, 0.0
      %v701 = vpack.c.bf16 %v686, %v685
      %v702 = vpack.c.bf16 %v688, %v687
      %v703 = vpack.c.bf16 %v690, %v689
      %v704 = vpack.c.bf16 %v692, %v691
      %v705 = vpack.c.bf16 %v694, %v693
      %v706 = vpack.c.bf16 %v696, %v695
      %v707 = vpack.c.bf16 %v698, %v697
      %v708 = vpack.c.bf16 %v700, %v699
      %v709 = vld [vmem:[%s5] sm:$0xf]
      %v710 = vld [vmem:[%s5 + $0x4] sm:$0xf]
      %v711 = vld [vmem:[%s6] sm:$0x1]
      %v713 = vperm.slane %v711, 0
      %v717 = vunpack.c.l.b16 %v709
      %v718 = vunpack.c.l.b16 %v710
      %v719 = vpack.c.b16 %v718, %v717
      %vm721 = vcmask 130048
      %v723 = vsel %vm721, %v701, 0
      %v726 = vsel %vm721, %v702, 0
      %v729 = vsel %vm721, %v703, 0
      %v732 = vsel %vm721, %v704, 0
      %v735 = vsel %vm721, %v705, 0
      %v738 = vsel %vm721, %v706, 0
      %v741 = vsel %vm721, %v707, 0
      %v744 = vsel %vm721, %v708, 0
      %746 = vmatpush.bf16.msra.mxu0 0
      %747 = vmatpush.bf16.msra.mxu0 0
      %748 = vmatpush.bf16.msra.mxu0 0
      %749 = vmatpush.bf16.msra.mxu0 0
      %750 = vmatpush.bf16.msra.mxu0 0
      %751 = vmatpush.bf16.msra.mxu0 0
      %752 = vmatpush.bf16.msra.mxu0 0
      %753 = vmatpush.bf16.msra.mxu0 %v719
      %754 = vmatmul.bf16.gmra.mxu0 %v723
      %v755 = vpop.f32.mrf.mxu0
      %v756 = vadd.f32 %v713, %v755
      %v757 = vpop.f32.mrf.mxu0
      %v758 = vadd.f32 %v713, %v757
      %759 = vmatmul.bf16.gmra.mxu0 %v726
      %v760 = vpop.f32.mrf.mxu0
      %v761 = vadd.f32 %v713, %v760
      %v762 = vpop.f32.mrf.mxu0
      %v763 = vadd.f32 %v713, %v762
      %764 = vmatmul.bf16.gmra.mxu0 %v729
      %v765 = vpop.f32.mrf.mxu0
      %v766 = vadd.f32 %v713, %v765
      %v767 = vpop.f32.mrf.mxu0
      %v768 = vadd.f32 %v713, %v767
      %769 = vmatmul.bf16.gmra.mxu0 %v732
      %v770 = vpop.f32.mrf.mxu0
      %v771 = vadd.f32 %v713, %v770
      %v772 = vpop.f32.mrf.mxu0
      %v773 = vadd.f32 %v713, %v772
      %774 = vmatmul.bf16.gmra.mxu0 %v735
      %v775 = vpop.f32.mrf.mxu0
      %v776 = vadd.f32 %v713, %v775
      %v777 = vpop.f32.mrf.mxu0
      %v778 = vadd.f32 %v713, %v777
      %779 = vmatmul.bf16.gmra.mxu0 %v738
      %v780 = vpop.f32.mrf.mxu0
      %v781 = vadd.f32 %v713, %v780
      %v782 = vpop.f32.mrf.mxu0
      %v783 = vadd.f32 %v713, %v782
      %784 = vmatmul.bf16.gmra.mxu0 %v741
      %v785 = vpop.f32.mrf.mxu0
      %v786 = vadd.f32 %v713, %v785
      %v787 = vpop.f32.mrf.mxu0
      %v788 = vadd.f32 %v713, %v787
      %789 = vmatmul.bf16.gmra.mxu0 %v744
      %v790 = vpop.f32.mrf.mxu0
      %v791 = vadd.f32 %v713, %v790
      %v792 = vpop.f32.mrf.mxu0
      %v793 = vadd.f32 %v713, %v792
      %794 = vdwg.mxu0
      %vm795 = vcmask 15360
      %v796 = vsel %vm795, %v756, -inf
      %797 = vmax.xlane.f32.xlu0 %v796
      %v798 = vpop.xlane.xlu0 %797
      %v799 = vsel %vm795, %v758, -inf
      %800 = vmax.xlane.f32.xlu0 %v799
      %v801 = vpop.xlane.xlu0 %800
      %v802 = vsel %vm795, %v761, -inf
      %803 = vmax.xlane.f32.xlu0 %v802
      %v804 = vpop.xlane.xlu0 %803
      %v805 = vsel %vm795, %v763, -inf
      %806 = vmax.xlane.f32.xlu0 %v805
      %v807 = vpop.xlane.xlu0 %806
      %v808 = vsel %vm795, %v766, -inf
      %809 = vmax.xlane.f32.xlu0 %v808
      %v810 = vpop.xlane.xlu0 %809
      %v811 = vsel %vm795, %v768, -inf
      %812 = vmax.xlane.f32.xlu0 %v811
      %v813 = vpop.xlane.xlu0 %812
      %v814 = vsel %vm795, %v771, -inf
      %815 = vmax.xlane.f32.xlu0 %v814
      %v816 = vpop.xlane.xlu0 %815
      %v817 = vsel %vm795, %v773, -inf
      %818 = vmax.xlane.f32.xlu0 %v817
      %v819 = vpop.xlane.xlu0 %818
      %v820 = vsel %vm795, %v776, -inf
      %821 = vmax.xlane.f32.xlu0 %v820
      %v822 = vpop.xlane.xlu0 %821
      %v823 = vsel %vm795, %v778, -inf
      %824 = vmax.xlane.f32.xlu0 %v823
      %v825 = vpop.xlane.xlu0 %824
      %v826 = vsel %vm795, %v781, -inf
      %827 = vmax.xlane.f32.xlu0 %v826
      %v828 = vpop.xlane.xlu0 %827
      %v829 = vsel %vm795, %v783, -inf
      %830 = vmax.xlane.f32.xlu0 %v829
      %v831 = vpop.xlane.xlu0 %830
      %v832 = vsel %vm795, %v786, -inf
      %833 = vmax.xlane.f32.xlu0 %v832
      %v834 = vpop.xlane.xlu0 %833
      %v835 = vsel %vm795, %v788, -inf
      %836 = vmax.xlane.f32.xlu0 %v835
      %v837 = vpop.xlane.xlu0 %836
      %v838 = vsel %vm795, %v791, -inf
      %839 = vmax.xlane.f32.xlu0 %v838
      %v840 = vpop.xlane.xlu0 %839
      %v841 = vsel %vm795, %v793, -inf
      %842 = vmax.xlane.f32.xlu0 %v841
      %v843 = vpop.xlane.xlu0 %842
      %v844 = vsub.f32 %v756, %v798
      %v845 = vsub.f32 %v758, %v801
      %v846 = vsub.f32 %v761, %v804
      %v847 = vsub.f32 %v763, %v807
      %v848 = vsub.f32 %v766, %v810
      %v849 = vsub.f32 %v768, %v813
      %v850 = vsub.f32 %v771, %v816
      %v851 = vsub.f32 %v773, %v819
      %v852 = vsub.f32 %v776, %v822
      %v853 = vsub.f32 %v778, %v825
      %v854 = vsub.f32 %v781, %v828
      %v855 = vsub.f32 %v783, %v831
      %v856 = vsub.f32 %v786, %v834
      %v857 = vsub.f32 %v788, %v837
      %v858 = vsub.f32 %v791, %v840
      %v859 = vsub.f32 %v793, %v843
      %v860 = vmul.f32 %v844, 1.442695
      %v861 = vpow.pop %v860
      %v862 = vmul.f32 %v845, 1.442695
      %v863 = vpow.pop %v862
      %v864 = vmul.f32 %v846, 1.442695
      %v865 = vpow.pop %v864
      %v866 = vmul.f32 %v847, 1.442695
      %v867 = vpow.pop %v866
      %v868 = vmul.f32 %v848, 1.442695
      %v869 = vpow.pop %v868
      %v870 = vmul.f32 %v849, 1.442695
      %v871 = vpow.pop %v870
      %v872 = vmul.f32 %v850, 1.442695
      %v873 = vpow.pop %v872
      %v874 = vmul.f32 %v851, 1.442695
      %v875 = vpow.pop %v874
      %v876 = vmul.f32 %v852, 1.442695
      %v877 = vpow.pop %v876
      %v878 = vmul.f32 %v853, 1.442695
      %v879 = vpow.pop %v878
      %v880 = vmul.f32 %v854, 1.442695
      %v881 = vpow.pop %v880
      %v882 = vmul.f32 %v855, 1.442695
      %v883 = vpow.pop %v882
      %v884 = vmul.f32 %v856, 1.442695
      %v885 = vpow.pop %v884
      %v886 = vmul.f32 %v857, 1.442695
      %v887 = vpow.pop %v886
      %v888 = vmul.f32 %v858, 1.442695
      %v889 = vpow.pop %v888
      %v890 = vmul.f32 %v859, 1.442695
      %v891 = vpow.pop %v890
      %v892 = vsel %vm795, %v861, 0.0
      %893 = vadd.xlane.f32.xlu0 %v892
      %v894 = vpop.xlane.xlu0 %893
      %v895 = vsel %vm795, %v863, 0.0
      %896 = vadd.xlane.f32.xlu0 %v895
      %v897 = vpop.xlane.xlu0 %896
      %v898 = vsel %vm795, %v865, 0.0
      %899 = vadd.xlane.f32.xlu0 %v898
      %v900 = vpop.xlane.xlu0 %899
      %v901 = vsel %vm795, %v867, 0.0
      %902 = vadd.xlane.f32.xlu0 %v901
      %v903 = vpop.xlane.xlu0 %902
      %v904 = vsel %vm795, %v869, 0.0
      %905 = vadd.xlane.f32.xlu0 %v904
      %v906 = vpop.xlane.xlu0 %905
      %v907 = vsel %vm795, %v871, 0.0
      %908 = vadd.xlane.f32.xlu0 %v907
      %v909 = vpop.xlane.xlu0 %908
      %v910 = vsel %vm795, %v873, 0.0
      %911 = vadd.xlane.f32.xlu0 %v910
      %v912 = vpop.xlane.xlu0 %911
      %v913 = vsel %vm795, %v875, 0.0
      %914 = vadd.xlane.f32.xlu0 %v913
      %v915 = vpop.xlane.xlu0 %914
      %v916 = vsel %vm795, %v877, 0.0
      %917 = vadd.xlane.f32.xlu0 %v916
      %v918 = vpop.xlane.xlu0 %917
      %v919 = vsel %vm795, %v879, 0.0
      %920 = vadd.xlane.f32.xlu0 %v919
      %v921 = vpop.xlane.xlu0 %920
      %v922 = vsel %vm795, %v881, 0.0
      %923 = vadd.xlane.f32.xlu0 %v922
      %v924 = vpop.xlane.xlu0 %923
      %v925 = vsel %vm795, %v883, 0.0
      %926 = vadd.xlane.f32.xlu0 %v925
      %v927 = vpop.xlane.xlu0 %926
      %v928 = vsel %vm795, %v885, 0.0
      %929 = vadd.xlane.f32.xlu0 %v928
      %v930 = vpop.xlane.xlu0 %929
      %v931 = vsel %vm795, %v887, 0.0
      %932 = vadd.xlane.f32.xlu0 %v931
      %v933 = vpop.xlane.xlu0 %932
      %v934 = vsel %vm795, %v889, 0.0
      %935 = vadd.xlane.f32.xlu0 %v934
      %v936 = vpop.xlane.xlu0 %935
      %v937 = vsel %vm795, %v891, 0.0
      %938 = vadd.xlane.f32.xlu0 %v937
      %v939 = vpop.xlane.xlu0 %938
      %v940 = vrcp.pop %v894
      %v941 = vmul.f32 %v894, %v940
      %v942 = vsub.f32 1.0, %v941
      %v943 = vmul.f32 %v940, %v942
      %v944 = vadd.f32 %v940, %v943
      %vm945 = vweird.f32 %v894
      %vm946 = vweird.f32 %v940
      %vm947 = vmor %vm945, %vm946
      %v948 = vsel %vm947, %v940, %v944
      %v949 = vand.u32 2147483647, %v894
      %vm950 = vcmp.eq.f32.partialorder %v949, 8.507059e+37
      %v951 = vand.u32 %v894, 2147483648
      %v952 = vor.u32 1.1754944e-38, %v951
      %v953 = vsel %vm950, %v952, %v948
      %v954 = vmul.f32 %v861, %v953
      %v955 = vrcp.pop %v897
      %v956 = vmul.f32 %v897, %v955
      %v957 = vsub.f32 1.0, %v956
      %v958 = vmul.f32 %v955, %v957
      %v959 = vadd.f32 %v955, %v958
      %vm960 = vweird.f32 %v897
      %vm961 = vweird.f32 %v955
      %vm962 = vmor %vm960, %vm961
      %v963 = vsel %vm962, %v955, %v959
      %v964 = vand.u32 2147483647, %v897
      %vm965 = vcmp.eq.f32.partialorder %v964, 8.507059e+37
      %v966 = vand.u32 %v897, 2147483648
      %v967 = vor.u32 1.1754944e-38, %v966
      %v968 = vsel %vm965, %v967, %v963
      %v969 = vmul.f32 %v863, %v968
      %v970 = vrcp.pop %v900
      %v971 = vmul.f32 %v900, %v970
      %v972 = vsub.f32 1.0, %v971
      %v973 = vmul.f32 %v970, %v972
      %v974 = vadd.f32 %v970, %v973
      %vm975 = vweird.f32 %v900
      %vm976 = vweird.f32 %v970
      %vm977 = vmor %vm975, %vm976
      %v978 = vsel %vm977, %v970, %v974
      %v979 = vand.u32 2147483647, %v900
      %vm980 = vcmp.eq.f32.partialorder %v979, 8.507059e+37
      %v981 = vand.u32 %v900, 2147483648
      %v982 = vor.u32 1.1754944e-38, %v981
      %v983 = vsel %vm980, %v982, %v978
      %v984 = vmul.f32 %v865, %v983
      %v985 = vrcp.pop %v903
      %v986 = vmul.f32 %v903, %v985
      %v987 = vsub.f32 1.0, %v986
      %v988 = vmul.f32 %v985, %v987
      %v989 = vadd.f32 %v985, %v988
      %vm990 = vweird.f32 %v903
      %vm991 = vweird.f32 %v985
      %vm992 = vmor %vm990, %vm991
      %v993 = vsel %vm992, %v985, %v989
      %v994 = vand.u32 2147483647, %v903
      %vm995 = vcmp.eq.f32.partialorder %v994, 8.507059e+37
      %v996 = vand.u32 %v903, 2147483648
      %v997 = vor.u32 1.1754944e-38, %v996
      %v998 = vsel %vm995, %v997, %v993
      %v999 = vmul.f32 %v867, %v998
      %v1000 = vrcp.pop %v906
      %v1001 = vmul.f32 %v906, %v1000
      %v1002 = vsub.f32 1.0, %v1001
      %v1003 = vmul.f32 %v1000, %v1002
      %v1004 = vadd.f32 %v1000, %v1003
      %vm1005 = vweird.f32 %v906
      %vm1006 = vweird.f32 %v1000
      %vm1007 = vmor %vm1005, %vm1006
      %v1008 = vsel %vm1007, %v1000, %v1004
      %v1009 = vand.u32 2147483647, %v906
      %vm1010 = vcmp.eq.f32.partialorder %v1009, 8.507059e+37
      %v1011 = vand.u32 %v906, 2147483648
      %v1012 = vor.u32 1.1754944e-38, %v1011
      %v1013 = vsel %vm1010, %v1012, %v1008
      %v1014 = vmul.f32 %v869, %v1013
      %v1015 = vrcp.pop %v909
      %v1016 = vmul.f32 %v909, %v1015
      %v1017 = vsub.f32 1.0, %v1016
      %v1018 = vmul.f32 %v1015, %v1017
      %v1019 = vadd.f32 %v1015, %v1018
      %vm1020 = vweird.f32 %v909
      %vm1021 = vweird.f32 %v1015
      %vm1022 = vmor %vm1020, %vm1021
      %v1023 = vsel %vm1022, %v1015, %v1019
      %v1024 = vand.u32 2147483647, %v909
      %vm1025 = vcmp.eq.f32.partialorder %v1024, 8.507059e+37
      %v1026 = vand.u32 %v909, 2147483648
      %v1027 = vor.u32 1.1754944e-38, %v1026
      %v1028 = vsel %vm1025, %v1027, %v1023
      %v1029 = vmul.f32 %v871, %v1028
      %v1030 = vrcp.pop %v912
      %v1031 = vmul.f32 %v912, %v1030
      %v1032 = vsub.f32 1.0, %v1031
      %v1033 = vmul.f32 %v1030, %v1032
      %v1034 = vadd.f32 %v1030, %v1033
      %vm1035 = vweird.f32 %v912
      %vm1036 = vweird.f32 %v1030
      %vm1037 = vmor %vm1035, %vm1036
      %v1038 = vsel %vm1037, %v1030, %v1034
      %v1039 = vand.u32 2147483647, %v912
      %vm1040 = vcmp.eq.f32.partialorder %v1039, 8.507059e+37
      %v1041 = vand.u32 %v912, 2147483648
      %v1042 = vor.u32 1.1754944e-38, %v1041
      %v1043 = vsel %vm1040, %v1042, %v1038
      %v1044 = vmul.f32 %v873, %v1043
      %v1045 = vrcp.pop %v915
      %v1046 = vmul.f32 %v915, %v1045
      %v1047 = vsub.f32 1.0, %v1046
      %v1048 = vmul.f32 %v1045, %v1047
      %v1049 = vadd.f32 %v1045, %v1048
      %vm1050 = vweird.f32 %v915
      %vm1051 = vweird.f32 %v1045
      %vm1052 = vmor %vm1050, %vm1051
      %v1053 = vsel %vm1052, %v1045, %v1049
      %v1054 = vand.u32 2147483647, %v915
      %vm1055 = vcmp.eq.f32.partialorder %v1054, 8.507059e+37
      %v1056 = vand.u32 %v915, 2147483648
      %v1057 = vor.u32 1.1754944e-38, %v1056
      %v1058 = vsel %vm1055, %v1057, %v1053
      %v1059 = vmul.f32 %v875, %v1058
      %v1060 = vrcp.pop %v918
      %v1061 = vmul.f32 %v918, %v1060
      %v1062 = vsub.f32 1.0, %v1061
      %v1063 = vmul.f32 %v1060, %v1062
      %v1064 = vadd.f32 %v1060, %v1063
      %vm1065 = vweird.f32 %v918
      %vm1066 = vweird.f32 %v1060
      %vm1067 = vmor %vm1065, %vm1066
      %v1068 = vsel %vm1067, %v1060, %v1064
      %v1069 = vand.u32 2147483647, %v918
      %vm1070 = vcmp.eq.f32.partialorder %v1069, 8.507059e+37
      %v1071 = vand.u32 %v918, 2147483648
      %v1072 = vor.u32 1.1754944e-38, %v1071
      %v1073 = vsel %vm1070, %v1072, %v1068
      %v1074 = vmul.f32 %v877, %v1073
      %v1075 = vrcp.pop %v921
      %v1076 = vmul.f32 %v921, %v1075
      %v1077 = vsub.f32 1.0, %v1076
      %v1078 = vmul.f32 %v1075, %v1077
      %v1079 = vadd.f32 %v1075, %v1078
      %vm1080 = vweird.f32 %v921
      %vm1081 = vweird.f32 %v1075
      %vm1082 = vmor %vm1080, %vm1081
      %v1083 = vsel %vm1082, %v1075, %v1079
      %v1084 = vand.u32 2147483647, %v921
      %vm1085 = vcmp.eq.f32.partialorder %v1084, 8.507059e+37
      %v1086 = vand.u32 %v921, 2147483648
      %v1087 = vor.u32 1.1754944e-38, %v1086
      %v1088 = vsel %vm1085, %v1087, %v1083
      %v1089 = vmul.f32 %v879, %v1088
      %v1090 = vrcp.pop %v924
      %v1091 = vmul.f32 %v924, %v1090
      %v1092 = vsub.f32 1.0, %v1091
      %v1093 = vmul.f32 %v1090, %v1092
      %v1094 = vadd.f32 %v1090, %v1093
      %vm1095 = vweird.f32 %v924
      %vm1096 = vweird.f32 %v1090
      %vm1097 = vmor %vm1095, %vm1096
      %v1098 = vsel %vm1097, %v1090, %v1094
      %v1099 = vand.u32 2147483647, %v924
      %vm1100 = vcmp.eq.f32.partialorder %v1099, 8.507059e+37
      %v1101 = vand.u32 %v924, 2147483648
      %v1102 = vor.u32 1.1754944e-38, %v1101
      %v1103 = vsel %vm1100, %v1102, %v1098
      %v1104 = vmul.f32 %v881, %v1103
      %v1105 = vrcp.pop %v927
      %v1106 = vmul.f32 %v927, %v1105
      %v1107 = vsub.f32 1.0, %v1106
      %v1108 = vmul.f32 %v1105, %v1107
      %v1109 = vadd.f32 %v1105, %v1108
      %vm1110 = vweird.f32 %v927
      %vm1111 = vweird.f32 %v1105
      %vm1112 = vmor %vm1110, %vm1111
      %v1113 = vsel %vm1112, %v1105, %v1109
      %v1114 = vand.u32 2147483647, %v927
      %vm1115 = vcmp.eq.f32.partialorder %v1114, 8.507059e+37
      %v1116 = vand.u32 %v927, 2147483648
      %v1117 = vor.u32 1.1754944e-38, %v1116
      %v1118 = vsel %vm1115, %v1117, %v1113
      %v1119 = vmul.f32 %v883, %v1118
      %v1120 = vrcp.pop %v930
      %v1121 = vmul.f32 %v930, %v1120
      %v1122 = vsub.f32 1.0, %v1121
      %v1123 = vmul.f32 %v1120, %v1122
      %v1124 = vadd.f32 %v1120, %v1123
      %vm1125 = vweird.f32 %v930
      %vm1126 = vweird.f32 %v1120
      %vm1127 = vmor %vm1125, %vm1126
      %v1128 = vsel %vm1127, %v1120, %v1124
      %v1129 = vand.u32 2147483647, %v930
      %vm1130 = vcmp.eq.f32.partialorder %v1129, 8.507059e+37
      %v1131 = vand.u32 %v930, 2147483648
      %v1132 = vor.u32 1.1754944e-38, %v1131
      %v1133 = vsel %vm1130, %v1132, %v1128
      %v1134 = vmul.f32 %v885, %v1133
      %v1135 = vrcp.pop %v933
      %v1136 = vmul.f32 %v933, %v1135
      %v1137 = vsub.f32 1.0, %v1136
      %v1138 = vmul.f32 %v1135, %v1137
      %v1139 = vadd.f32 %v1135, %v1138
      %vm1140 = vweird.f32 %v933
      %vm1141 = vweird.f32 %v1135
      %vm1142 = vmor %vm1140, %vm1141
      %v1143 = vsel %vm1142, %v1135, %v1139
      %v1144 = vand.u32 2147483647, %v933
      %vm1145 = vcmp.eq.f32.partialorder %v1144, 8.507059e+37
      %v1146 = vand.u32 %v933, 2147483648
      %v1147 = vor.u32 1.1754944e-38, %v1146
      %v1148 = vsel %vm1145, %v1147, %v1143
      %v1149 = vmul.f32 %v887, %v1148
      %v1150 = vrcp.pop %v936
      %v1151 = vmul.f32 %v936, %v1150
      %v1152 = vsub.f32 1.0, %v1151
      %v1153 = vmul.f32 %v1150, %v1152
      %v1154 = vadd.f32 %v1150, %v1153
      %vm1155 = vweird.f32 %v936
      %vm1156 = vweird.f32 %v1150
      %vm1157 = vmor %vm1155, %vm1156
      %v1158 = vsel %vm1157, %v1150, %v1154
      %v1159 = vand.u32 2147483647, %v936
      %vm1160 = vcmp.eq.f32.partialorder %v1159, 8.507059e+37
      %v1161 = vand.u32 %v936, 2147483648
      %v1162 = vor.u32 1.1754944e-38, %v1161
      %v1163 = vsel %vm1160, %v1162, %v1158
      %v1164 = vmul.f32 %v889, %v1163
      %v1165 = vrcp.pop %v939
      %v1166 = vmul.f32 %v939, %v1165
      %v1167 = vsub.f32 1.0, %v1166
      %v1168 = vmul.f32 %v1165, %v1167
      %v1169 = vadd.f32 %v1165, %v1168
      %vm1170 = vweird.f32 %v939
      %vm1171 = vweird.f32 %v1165
      %vm1172 = vmor %vm1170, %vm1171
      %v1173 = vsel %vm1172, %v1165, %v1169
      %v1174 = vand.u32 2147483647, %v939
      %vm1175 = vcmp.eq.f32.partialorder %v1174, 8.507059e+37
      %v1176 = vand.u32 %v939, 2147483648
      %v1177 = vor.u32 1.1754944e-38, %v1176
      %v1178 = vsel %vm1175, %v1177, %v1173
      %v1179 = vmul.f32 %v891, %v1178
      %1180 = vst.msk [vmem:[%s283] sm:$0xff] %vm795, %v954
      %1181 = vst.msk [vmem:[%s283 + $0x8] sm:$0xff] %vm795, %v969
      %1182 = vst.msk [vmem:[%s283 + $0x10] sm:$0xff] %vm795, %v984
      %1183 = vst.msk [vmem:[%s283 + $0x18] sm:$0xff] %vm795, %v999
      %1184 = vst.msk [vmem:[%s283 + $0x20] sm:$0xff] %vm795, %v1014
      %1185 = vst.msk [vmem:[%s283 + $0x28] sm:$0xff] %vm795, %v1029
      %1186 = vst.msk [vmem:[%s283 + $0x30] sm:$0xff] %vm795, %v1044
      %1187 = vst.msk [vmem:[%s283 + $0x38] sm:$0xff] %vm795, %v1059
      %1188 = vst.msk [vmem:[%s283 + $0x40] sm:$0xff] %vm795, %v1074
      %1189 = vst.msk [vmem:[%s283 + $0x48] sm:$0xff] %vm795, %v1089
      %1190 = vst.msk [vmem:[%s283 + $0x50] sm:$0xff] %vm795, %v1104
      %1191 = vst.msk [vmem:[%s283 + $0x58] sm:$0xff] %vm795, %v1119
      %1192 = vst.msk [vmem:[%s283 + $0x60] sm:$0xff] %vm795, %v1134
      %1193 = vst.msk [vmem:[%s283 + $0x68] sm:$0xff] %vm795, %v1149
      %1194 = vst.msk [vmem:[%s283 + $0x70] sm:$0xff] %vm795, %v1164
      %1195 = vst.msk [vmem:[%s283 + $0x78] sm:$0xff] %vm795, %v1179
      %s1196 = smul.u32 16, %s18
      %p1197 = scmp.lt.s32.totalorder %s1196, 31
      %s1198 = scalar_select %p1197, %s1196, 31
      %s1199 = smul.addr %s1198, 8
      %s1200 = scalar_lea.vmem %s7, %s1199
      // Predicated region
      $region49: #{neural_net_forward.1} parent=47 // pred_check
        %p1201 = pneg %p188
      $region50: #{neural_net_forward.1} parent=47 // pred_check_branch
        %1203 = sbr.rel (%p1201) target = $region52
      $region51: #{neural_net_forward.1} parent=47 // pred_region
        %s1204 = smul.u32 16, %s18
      $region52: #{neural_net_forward.1} parent=47 // pred_fallthru
        _
    $region48: #{neural_net_forward.1} parent=5 // pred_fallthru
      _
    %p1205 = scmp.le.s32.totalorder 2, %s13
    // Predicated region
    $region53: #{neural_net_forward.1} parent=5 // pred_check
      %p1206 = pneg %p1205
    $region54: #{neural_net_forward.1} parent=5 // pred_check_branch
      %1208 = sbr.rel (%p1206) target = $region56
    $region55: #{neural_net_forward.1} parent=5 // pred_region
      %s1209 = ssub.s32 %s13, 2
      // Predicated region
      $region57: #{neural_net_forward.1} parent=55 // pred_check
        %p1210 = pneg %p194
      $region58: #{neural_net_forward.1} parent=55 // pred_check_branch
        %1212 = sbr.rel (%p1210) target = $region60
      $region59: #{neural_net_forward.1} parent=55 // pred_region
        %s1213 = smul.u32 16, %s19
        %p1214 = scmp.lt.s32.totalorder %s1213, 31
        %s1215 = scalar_select %p1214, %s1213, 31
        %s1216 = smul.addr %s1215, 8
        %s1217 = scalar_lea.vmem %s7, %s1216
      $region60: #{neural_net_forward.1} parent=55 // pred_fallthru
        _
    $region56: #{neural_net_forward.1} parent=5 // pred_fallthru
      _
  $region6: #{neural_net_forward.1} parent=0 // loop_footer
    %s17 = sadd.s32 1, %s13
  $region7: #{neural_net_forward.1} parent=0 // loop_footer_branch
    %12 = sbr.rel target = $region3
  $region8: #{neural_net_forward.1} parent=0 // loop_exit
    _

</llo_original>
